<compile_context>
chip_gen: v6e
topology: v6e:2x2x1
jax: 0.10.0
libtpu: 0.0.40
codegen_flags: <defaults>
</compile_context>

<pallas_src>
import functools
import math

import numpy as np

import jax
import jax.numpy as jnp
from jax.experimental import pallas as pl
from jax.experimental.pallas import tpu as pltpu

_LANES = 128
_SUBLANES = 8


def _align_rows(d):
    """Rows of 128 lanes after which the per-dim constant pattern repeats,
    rounded up to sublane (8) granularity."""
    period_rows = math.lcm(d, _LANES) // _LANES
    return math.lcm(period_rows, _SUBLANES)


# ---------------------------------------------------------------------------
# Kernels
# ---------------------------------------------------------------------------
def _idx_kernel_scalar(x_ref, o_ref, *, scale, bias, hi):
    # Uniform-grid fast path: constants are compile-time scalars.
    o_ref[...] = jnp.clip(x_ref[...] * scale + bias, 0.0, hi)


def _idx_kernel_vec(x_ref, scale_ref, bias_ref, hi_ref, o_ref):
    # x_ref: (ts, a_rows, 128); constants: (a_rows, 128) resident blocks that
    # broadcast over the leading slab axis via trailing-dim broadcasting.
    o_ref[...] = jnp.clip(x_ref[...] * scale_ref[...] + bias_ref[...],
                          0.0, hi_ref[...])


# ---------------------------------------------------------------------------
# Wrapper
# ---------------------------------------------------------------------------
def _run_main_kernel(x_main, d, a_rows, consts, uniform, block_slabs=None):
    """x_main: (m, d) f32 with (m * d) % (a_rows * 128) == 0."""
    m = x_main.shape[0]
    num_slabs = (m * d) // (a_rows * _LANES)
    x3 = x_main.reshape(num_slabs, a_rows, _LANES)

    slab_bytes = a_rows * _LANES * 4
    if block_slabs is None:
        ts = max(1, (2 * 1024 * 1024) // slab_bytes)      # ~2 MiB data blocks
        ts = min(ts, num_slabs)
        if num_slabs >= 2:                                # v7x megacore: >= 2 steps
            ts = min(ts, pl.cdiv(num_slabs, 2))
    else:
        ts = max(1, min(block_slabs, num_slabs))
    num_blocks = pl.cdiv(num_slabs, ts)

    data_spec = pl.BlockSpec((ts, a_rows, _LANES), lambda i: (i, 0, 0))
    out_spec = pl.BlockSpec((ts, a_rows, _LANES), lambda i: (i, 0, 0))

    total = num_slabs * a_rows * _LANES
    inv_np, bias_np, hi_np = consts

    if uniform:
        kernel = functools.partial(
            _idx_kernel_scalar,
            scale=float(inv_np[0]), bias=float(bias_np[0]), hi=float(hi_np[0]))
        in_specs = [data_spec]
        args = (x3,)
        const_bytes = 0
    else:
        reps = (a_rows * _LANES) // d
        def tile_const(v):  # built host-side with numpy: no per-call XLA tile ops
            return jnp.asarray(
                np.tile(v.astype(np.float32), reps).reshape(a_rows, _LANES))
        const_spec = pl.BlockSpec((a_rows, _LANES), lambda i: (0, 0))
        kernel = _idx_kernel_vec
        in_specs = [data_spec, const_spec, const_spec, const_spec]
        args = (x3, tile_const(inv_np), tile_const(bias_np), tile_const(hi_np))
        const_bytes = 3 * a_rows * _LANES * 4

    out3 = pl.pallas_call(
        kernel,
        out_shape=jax.ShapeDtypeStruct((num_slabs, a_rows, _LANES), jnp.float32),
        grid_spec=pl.GridSpec(
            grid=(num_blocks,),
            in_specs=in_specs,
            out_specs=out_spec),
        compiler_params=pltpu.CompilerParams(
            dimension_semantics=("parallel",),
            vmem_limit_bytes=32 * 1024 * 1024),
        cost_estimate=pl.CostEstimate(
            flops=4 * total, transcendentals=0,
            bytes_accessed=2 * total * 4 + const_bytes),
    )(*args)
    return out3.reshape(m, d)


def regular_grid_interpolator_idx(x, start, end, grid_shape, *, block_slabs=None):
    """clamp((x - start) / spacing, 0, shape - 1) via a Pallas TPU kernel.

    start / end / grid_shape are host-static module parameters (they are fixed
    buffers set in the PyTorch module's __init__).
    """
    x = jnp.asarray(x, jnp.float32)
    n, d = x.shape

    start_h = np.asarray(start, np.float64).reshape(d)
    end_h = np.asarray(end, np.float64).reshape(d)
    shape_h = np.asarray(grid_shape, np.float64).reshape(d)

    # Reference module semantics: spacing = (end - start) / shape.
    # TODO(synk): confirm cell-count ((shape)) vs node-count ((shape - 1))
    # convention; end == start gives inf/nan, matching the PyTorch reference.
    spacing = (end_h - start_h) / shape_h
    inv_spacing = 1.0 / spacing       # divides hoisted to the host
    bias = -start_h * inv_spacing     # kernel body is a single FMA + clip
    hi = shape_h - 1.0

    uniform = bool(np.all(inv_spacing == inv_spacing[0])
                   and np.all(bias == bias[0])
                   and np.all(hi == hi[0]))
    consts = (inv_spacing.astype(np.float32),
              bias.astype(np.float32),
              hi.astype(np.float32))

    a_rows = _align_rows(d)
    pps = (a_rows * _LANES) // d      # query points per (a_rows, 128) slab

    if n >= pps:
        n_main = (n // pps) * pps
        out_main = _run_main_kernel(x if n_main == n else x[:n_main],
                                    d, a_rows, consts, uniform, block_slabs)
        if n_main == n:
            return out_main
        # Ragged tail (< one slab): plain jnp -- avoids a full-array pad copy
        # and a full-array output slice around the custom call.
        inv_j, bias_j, hi_j = (jnp.asarray(c) for c in consts)
        out_tail = jnp.clip(x[n_main:] * inv_j + bias_j, 0.0, hi_j)
        return jnp.concatenate([out_main, out_tail], axis=0)

    # Tiny input (< one slab): pad to a single slab and slice (negligible).
    x_pad = jnp.pad(x, ((0, pps - n), (0, 0)))
    return _run_main_kernel(x_pad, d, a_rows, consts, uniform, block_slabs)[:n]


def _reference_idx(x, start, end, grid_shape):
    x = jnp.asarray(x, jnp.float32)
    start = jnp.asarray(start, jnp.float32)
    end = jnp.asarray(end, jnp.float32)
    shape_f = jnp.asarray(grid_shape, jnp.float32)
    spacing = (end - start) / shape_f
    return jnp.clip((x - start) / spacing, 0.0, shape_f - 1.0)


if __name__ == "__main__":
    key = jax.random.PRNGKey(0)
    k1, k2, k3 = jax.random.split(key, 3)

    # Case 1: uniform 3-D grid (16,16,16) over [0,1]^3, N a multiple of the
    # slab size -> scalar-constant fast path, no padding, 2 parallel blocks.
    shape1, start1, end1 = (16, 16, 16), (0.0, 0.0, 0.0), (1.0, 1.0, 1.0)
    n1 = 2048
    x1 = jax.random.uniform(k1, (n1, 3), jnp.float32, minval=-0.25, maxval=1.25)
    out1 = jax.block_until_ready(
        regular_grid_interpolator_idx(x1, start1, end1, shape1))
    ref1 = _reference_idx(x1, start1, end1, shape1)
    assert out1.shape == (n1, 3) and out1.dtype == jnp.float32
    assert jnp.allclose(out1, ref1, atol=1e-4, rtol=1e-5)

    # Case 2: non-uniform per-dimension grid + ragged N -> small resident
    # (align_rows, 128) constant blocks in the kernel + plain-jnp tail.
    shape2, start2, end2 = (16, 8, 32), (0.0, -1.0, 2.0), (1.0, 1.0, 10.0)
    n2 = 2600
    x2 = jax.random.uniform(k2, (n2, 3), jnp.float32, minval=-2.0, maxval=12.0)
    out2 = jax.block_until_ready(
        regular_grid_interpolator_idx(x2, start2, end2, shape2))
    ref2 = _reference_idx(x2, start2, end2, shape2)
    assert out2.shape == (n2, 3)
    assert jnp.allclose(out2, ref2, atol=1e-4, rtol=1e-5)

    # Case 3: tiny N (< one slab) -> single padded slab path.
    n3 = 100
    x3 = jax.random.uniform(k3, (n3, 3), jnp.float32, minval=-0.5, maxval=1.5)
    out3 = jax.block_until_ready(
        regular_grid_interpolator_idx(x3, start2, end2, shape2))
    ref3 = _reference_idx(x3, start2, end2, shape2)
    assert out3.shape == (n3, 3)
    assert jnp.allclose(out3, ref3, atol=1e-4, rtol=1e-5)

    print("KERNEL_OK")
</pallas_src>

<mosaic_0001>
module attributes {stable_mosaic.version = 11 : i64} {
  func.func @_idx_kernel_scalar(%arg0: i32, %arg1: memref<1x24x128xf32, #tpu.memory_space<vmem>>, %arg2: memref<1x24x128xf32, #tpu.memory_space<vmem>>) attributes {dimension_semantics = [#tpu.dimension_semantics<parallel>], iteration_bounds = array<i64: 2>, scalar_prefetch = 0 : i64, scratch_operands = 0 : i64, tpu.core_type = #tpu.core_type<tc>, window_params = [{transform_indices = @transform_0, window_bounds = array<i64: 1, 24, 128>}, {transform_indices = @transform_1, window_bounds = array<i64: 1, 24, 128>}]} {
    %c0 = arith.constant 0 : index
    %c0_0 = arith.constant 0 : index
    %c0_1 = arith.constant 0 : index
    %0 = vector.load %arg1[%c0, %c0_0, %c0_1] : memref<1x24x128xf32, #tpu.memory_space<vmem>>, vector<1x24x128xf32>
    %cst = arith.constant 1.600000e+01 : f32
    %1 = vector.broadcast %cst : f32 to vector<1x24x128xf32>
    %2 = arith.mulf %0, %1 : vector<1x24x128xf32>
    %cst_2 = arith.constant -0.000000e+00 : f32
    %3 = vector.broadcast %cst_2 : f32 to vector<1x24x128xf32>
    %4 = arith.addf %2, %3 : vector<1x24x128xf32>
    %cst_3 = arith.constant 0.000000e+00 : f32
    %cst_4 = arith.constant 1.500000e+01 : f32
    %5 = vector.broadcast %cst_3 : f32 to vector<1x24x128xf32>
    %6 = arith.maximumf %5, %4 : vector<1x24x128xf32>
    %7 = vector.broadcast %cst_4 : f32 to vector<1x24x128xf32>
    %8 = arith.minimumf %7, %6 : vector<1x24x128xf32>
    %c0_5 = arith.constant 0 : index
    %c0_6 = arith.constant 0 : index
    %c0_7 = arith.constant 0 : index
    %9 = vector.load %arg2[%c0_5, %c0_6, %c0_7] : memref<1x24x128xf32, #tpu.memory_space<vmem>>, vector<1x24x128xf32>
    tpu.vector_store %arg2[%c0_5, %c0_6, %c0_7], %8 {strides = array<i32>} : memref<1x24x128xf32, #tpu.memory_space<vmem>>, vector<1x24x128xf32>,
    return
  }
  func.func @transform_0(%arg0: i32) -> (i32, i32, i32) {
    %c0_i32 = arith.constant 0 : i32
    %c0_i32_0 = arith.constant 0 : i32
    %c0_i32_1 = arith.constant 0 : i32
    return %arg0, %c0_i32, %c0_i32_0 : i32, i32, i32
  }
  func.func @transform_1(%arg0: i32) -> (i32, i32, i32) {
    %c0_i32 = arith.constant 0 : i32
    %c0_i32_0 = arith.constant 0 : i32
    %c0_i32_1 = arith.constant 0 : i32
    return %arg0, %c0_i32, %c0_i32_0 : i32, i32, i32
  }
}

</mosaic_0001>

<llo_original>
// kernel: tpu_custom_call.1
$region0: #{tpu_custom_call.1}
  #allocation0 [shape = 'u32[]', space=smem, size = 0x4, offset = 0x4, fixed_abs, tag = 'smem constant byte address 0x4 - core index']
  #allocation1 [shape = 'u32[144,128]{1,0:T(1,128)}', space=vmem, size = 0x12000, scoped, tag = 'internal scratch']
  %s0 = inlined_call_operand.hbm [shape: f32[2,24,128], index: 0, kind: input, shape index: {}]
  %s1 = inlined_call_operand.hbm [shape: f32[2,24,128], index: 1, kind: output, shape index: {}]
  %s2 = sld [smem:[#allocation0]]
  $region41: #{tpu_custom_call.1} parent=0
    _
  %s4 = ssub.s32 1, %s2
  %s5 = scalar_select 0, %s4, %s2
  $region1: #{tpu_custom_call.1} parent=0
    #allocation2 [shape = 'u8[24576]{0}', space=vmem, size = 0x6000, scoped, tag = 'input window, operand 0']
    #allocation3 [shape = 's32[2]{0}', space=sflag, size = 0x8, scoped, tag = 'scoped memory for tpu_custom_call.1']
    #allocation4 [shape = 's32[2]{0}', space=sflag, size = 0x8, scoped, tag = 'scoped memory for tpu_custom_call.1']
    #allocation5 [shape = 'u8[24576]{0}', space=vmem, size = 0x6000, scoped, tag = 'output window, operand 0']
    %6 = vsyncpa [#allocation3], 0
    %s7 = scalar_lea.sflag [#allocation3], 1
    %8 = vsyncpa %s7, 0
    %9 = vsyncpa [#allocation4], 0
    %s10 = scalar_lea.sflag [#allocation4], 1
    %11 = vsyncpa %s10, 0
    loop: start=0, step=1, limit=4
    $region2: #{tpu_custom_call.1} parent=1 // loop_pre_header
      _
    $region3: #{tpu_custom_call.1} parent=1 // loop_header
      %s13 = sphi 0, %s17
      %p14 = scmp.ge.s32.totalorder %s13, 4
      %s23 = sphi 0, %s25
      %s26 = sphi 0, %s23
      %s27 = sphi 0, %s26
      %s43 = sphi 0, %s27
      %s49 = sphi 0, %s51
      %s52 = sphi 0, %s49
      %s53 = sphi 0, %s52
      %s69 = sphi 0, %s53
    $region4: #{tpu_custom_call.1} parent=1 // loop_header_branch
      %16 = sbr.rel (%p14) target = $region8
    $region5: #{tpu_custom_call.1} parent=1 // loop_body
      %s18 = ssub.s32 %s13, 1
      %s19 = ssub.s32 %s13, 2
      %s20 = sadd.s32 %s13, 1
      %s21 = ssub.s32 %s13, %s20
      %p22 = scmp.eq.s32.totalorder %s21, 0
      %s24 = sadd.s32 %s23, 1
      %s25 = scalar_select %p22, %s23, %s24
      %p28 = pneg %p22
      %p29 = scmp.eq.s32.totalorder %s13, 1
      %p30 = por %p28, %p29
      %p31 = scmp.ne.s32.totalorder %s23, %s26
      %p32 = scmp.eq.s32.totalorder %s13, 0
      %p33 = por %p31, %p32
      %p34 = scmp.ne.s32.totalorder %s23, %s26
      %p35 = scmp.eq.s32.totalorder %s18, 1
      %p36 = por %p34, %p35
      %p37 = scmp.ne.s32.totalorder %s26, %s27
      %p38 = scmp.eq.s32.totalorder %s18, 0
      %p39 = por %p37, %p38
      %p40 = scmp.ne.s32.totalorder %s26, %s27
      %p41 = scmp.eq.s32.totalorder %s19, 1
      %p42 = por %p40, %p41
      %p44 = scmp.ne.s32.totalorder %s27, %s43
      %p45 = scmp.eq.s32.totalorder %s19, 0
      %p46 = por %p44, %p45
      %s47 = ssub.s32 %s13, %s20
      %p48 = scmp.eq.s32.totalorder %s47, 0
      %s50 = sadd.s32 %s49, 1
      %s51 = scalar_select %p48, %s49, %s50
      %p54 = pneg %p48
      %p55 = scmp.eq.s32.totalorder %s13, 1
      %p56 = por %p54, %p55
      %p57 = scmp.ne.s32.totalorder %s49, %s52
      %p58 = scmp.eq.s32.totalorder %s13, 0
      %p59 = por %p57, %p58
      %p60 = scmp.ne.s32.totalorder %s49, %s52
      %p61 = scmp.eq.s32.totalorder %s18, 1
      %p62 = por %p60, %p61
      %p63 = scmp.ne.s32.totalorder %s52, %s53
      %p64 = scmp.eq.s32.totalorder %s18, 0
      %p65 = por %p63, %p64
      %p66 = scmp.ne.s32.totalorder %s52, %s53
      %p67 = scmp.eq.s32.totalorder %s19, 1
      %p68 = por %p66, %p67
      %p70 = scmp.ne.s32.totalorder %s53, %s69
      %p71 = scmp.eq.s32.totalorder %s19, 0
      %p72 = por %p70, %p71
      %p73 = scmp.le.s32.totalorder 1, %s13
      %p74 = scmp.lt.s32.totalorder %s13, 3
      %p75 = pnand %p73, %p74
      %p76 = pneg %p75
      // Predicated region
      $region9: #{tpu_custom_call.1} parent=5 // pred_check
        _
      $region10: #{tpu_custom_call.1} parent=5 // pred_check_branch
        %78 = sbr.rel (%p75) target = $region12
      $region11: #{tpu_custom_call.1} parent=5 // pred_region
        %s79 = ssub.s32 %s13, 1
      $region12: #{tpu_custom_call.1} parent=5 // pred_fallthru
        _
      %p80 = scmp.lt.s32.totalorder %s13, 2
      // Predicated region
      $region13: #{tpu_custom_call.1} parent=5 // pred_check
        %p81 = pneg %p80
      $region14: #{tpu_custom_call.1} parent=5 // pred_check_branch
        %83 = sbr.rel (%p81) target = $region16
      $region15: #{tpu_custom_call.1} parent=5 // pred_region
        // Predicated region
        $region17: #{tpu_custom_call.1} parent=15 // pred_check
          %p84 = pneg %p33
        $region18: #{tpu_custom_call.1} parent=15 // pred_check_branch
          %86 = sbr.rel (%p84) target = $region20
        $region19: #{tpu_custom_call.1} parent=15 // pred_region
          %s87 = sand.u32 %s23, 1
          %s88 = scalar_lea.sflag [#allocation3], %s87
          %s89 = sand.u32 %s23, 1
          %s90 = smul.addr %s89, 24
          %s91 = scalar_lea.vmem [#allocation2], %s90
          %s93 = ssub.s32 384, 384
          %94 = vsyncadd %s88, %s93
          %s95 = smul.addr %s13, 3
          %s96 = smul.addr %s95, 128
          %s97 = scalar_lea.hbm %s0, %s96
          %s98 = sshll.u32 %s91, 4
          %s99 = int_to_ptr.vmem [resolvable:$true] %s98
          %104 = dma.hbm_to_vmem [thread:$0]  %s97, 384, %s99, %s88, 128, 128, 8
        $region20: #{tpu_custom_call.1} parent=15 // pred_fallthru
          _
      $region16: #{tpu_custom_call.1} parent=5 // pred_fallthru
        _
      %p105 = scmp.le.s32.totalorder 1, %s13
      %p106 = scmp.lt.s32.totalorder %s13, 3
      %p107 = pnand %p105, %p106
      %p108 = pneg %p107
      // Predicated region
      $region21: #{tpu_custom_call.1} parent=5 // pred_check
        _
      $region22: #{tpu_custom_call.1} parent=5 // pred_check_branch
        %110 = sbr.rel (%p107) target = $region24
      $region23: #{tpu_custom_call.1} parent=5 // pred_region
        %s111 = ssub.s32 %s13, 1
        %s112 = sand.u32 %s26, 1
        %s113 = scalar_lea.sflag [#allocation3], %s112
        %s114 = sand.u32 %s26, 1
        %s115 = smul.addr %s114, 24
        %s116 = scalar_lea.vmem [#allocation2], %s115
        // Predicated region
        $region25: #{tpu_custom_call.1} parent=23 // pred_check
          %p117 = pneg %p39
        $region26: #{tpu_custom_call.1} parent=23 // pred_check_branch
          %119 = sbr.rel (%p117) target = $region28
        $region27: #{tpu_custom_call.1} parent=23 // pred_region
          %120 = dma.done %s113, 384
        $region28: #{tpu_custom_call.1} parent=23 // pred_fallthru
          _
        %s121 = sand.u32 %s26, 1
        %s122 = scalar_lea.sflag [#allocation3], %s121
        %s123 = sand.u32 %s26, 1
        %s124 = smul.addr %s123, 24
        %s125 = scalar_lea.vmem [#allocation2], %s124
        %p126 = pneg %p39
        %p127 = pneg %p36
        %p128 = pneg %p65
        %p129 = pneg %p62
        %s130 = sand.u32 %s52, 1
        %s131 = scalar_lea.sflag [#allocation4], %s130
        %s132 = sand.u32 %s52, 1
        %s133 = smul.addr %s132, 24
        %s134 = scalar_lea.vmem [#allocation5], %s133
        %v135 = vld [vmem:[%s116] sm:$0xff]
        %v136 = vld [vmem:[%s116 + $0x8] sm:$0xff]
        %v137 = vld [vmem:[%s116 + $0x10] sm:$0xff]
        %v138 = vmul.f32 %v135, 16.0
        %v139 = vmul.f32 %v136, 16.0
        %v140 = vmul.f32 %v137, 16.0
        %v141 = vmax.f32 %v138, 0.0
        %v142 = vmax.f32 %v139, 0.0
        %v143 = vmax.f32 %v140, 0.0
        %v144 = vmin.f32 %v141, 15.0
        %v145 = vmin.f32 %v142, 15.0
        %v146 = vmin.f32 %v143, 15.0
        %147 = vst [vmem:[%s134] sm:$0xff] %v144
        %148 = vst [vmem:[%s134 + $0x8] sm:$0xff] %v145
        %149 = vst [vmem:[%s134 + $0x10] sm:$0xff] %v146
        %s150 = sand.u32 %s52, 1
        %s151 = scalar_lea.sflag [#allocation4], %s150
        %s152 = sand.u32 %s52, 1
        %s153 = smul.addr %s152, 24
        %s154 = scalar_lea.vmem [#allocation5], %s153
        // Predicated region
        $region29: #{tpu_custom_call.1} parent=23 // pred_check
          %p155 = pneg %p62
        $region30: #{tpu_custom_call.1} parent=23 // pred_check_branch
          %157 = sbr.rel (%p155) target = $region32
        $region31: #{tpu_custom_call.1} parent=23 // pred_region
          %s159 = ssub.s32 384, 384
          %160 = vsyncadd %s151, %s159
          %s161 = smul.addr %s18, 3
          %s162 = smul.addr %s161, 128
          %s163 = scalar_lea.hbm %s1, %s162
          %s164 = sshll.u32 %s154, 4
          %s165 = int_to_ptr.vmem [resolvable:$true] %s164
          %170 = dma.vmem_to_hbm [thread:$0]  %s165, 384, %s163, %s151, 128, 128, 8
        $region32: #{tpu_custom_call.1} parent=23 // pred_fallthru
          _
      $region24: #{tpu_custom_call.1} parent=5 // pred_fallthru
        _
      %p171 = scmp.le.s32.totalorder 2, %s13
      // Predicated region
      $region33: #{tpu_custom_call.1} parent=5 // pred_check
        %p172 = pneg %p171
      $region34: #{tpu_custom_call.1} parent=5 // pred_check_branch
        %174 = sbr.rel (%p172) target = $region36
      $region35: #{tpu_custom_call.1} parent=5 // pred_region
        %s175 = ssub.s32 %s13, 2
        // Predicated region
        $region37: #{tpu_custom_call.1} parent=35 // pred_check
          %p176 = pneg %p68
        $region38: #{tpu_custom_call.1} parent=35 // pred_check_branch
          %178 = sbr.rel (%p176) target = $region40
        $region39: #{tpu_custom_call.1} parent=35 // pred_region
          %s179 = sand.u32 %s53, 1
          %s180 = scalar_lea.sflag [#allocation4], %s179
          %s181 = sand.u32 %s53, 1
          %s182 = smul.addr %s181, 24
          %s183 = scalar_lea.vmem [#allocation5], %s182
          %184 = dma.done %s180, 384
        $region40: #{tpu_custom_call.1} parent=35 // pred_fallthru
          _
      $region36: #{tpu_custom_call.1} parent=5 // pred_fallthru
        _
    $region6: #{tpu_custom_call.1} parent=1 // loop_footer
      %s17 = sadd.s32 1, %s13
    $region7: #{tpu_custom_call.1} parent=1 // loop_footer_branch
      %12 = sbr.rel target = $region3
    $region8: #{tpu_custom_call.1} parent=1 // loop_exit
      _
    %185 = vsyncpa [#allocation3], 1
    %s186 = scalar_lea.sflag [#allocation3], 1
    %187 = vsyncpa %s186, 1
    %188 = vsyncpa [#allocation4], 1
    %s189 = scalar_lea.sflag [#allocation4], 1
    %190 = vsyncpa %s189, 1

</llo_original>
